<compile_context>
chip_gen: v7x
topology: tpu7x:2x2x1
jax: 0.10.0
libtpu: 0.0.40
codegen_flags: <defaults>
</compile_context>

<pallas_src>
import jax
import jax.numpy as jnp
from jax.experimental import pallas as pl
from jax.experimental.pallas import tpu as pltpu

HIDDEN = 128


def _has_bf16_vpu():
    """bf16 VALUs exist on v6e/v7x; v5e and earlier do elementwise bf16 slowly."""
    try:
        kind = jax.devices()[0].device_kind.lower()
    except Exception:
        return False
    return not any(tag in kind for tag in ("v2", "v3", "v4", "v5"))


def value_net_kernel(x_ref, w1_ref, b1_ref, w2_ref, b2_ref, w3_ref, b3_ref, o_ref):
    # x block: (input_size, TB) bf16, batch on the lane axis (lane-dense).
    act_dtype = b1_ref.dtype   # bf16 on v6e/v7x, f32 on v5e
    mm_dtype = w2_ref.dtype    # bf16 MXU inputs

    # Layer 1: (128, in) @ (in, TB) on the MXU, f32 accumulation.
    a1 = jnp.dot(w1_ref[...], x_ref[...], preferred_element_type=jnp.float32)
    h1 = jnp.maximum(a1.astype(act_dtype) + b1_ref[...], 0).astype(mm_dtype)

    # Layer 2: (128, 128) @ (128, TB), bf16 in / f32 accumulate.
    a2 = jnp.dot(w2_ref[...], h1, preferred_element_type=jnp.float32)
    h2 = jnp.maximum(a2.astype(act_dtype) + b2_ref[...], 0).astype(mm_dtype)

    # Layer 3: 128 -> 1 as a (1,128)@(128,TB) MXU dot (slack on the MXU; no
    # per-step lane re-broadcast of w3).  Result is lane-dense (1, TB) f32.
    o_ref[...] = (jnp.dot(w3_ref[...], h2, preferred_element_type=jnp.float32)
                  + b3_ref[0, 0])


def value_network_forward(x, w1, b1, w2, b2, w3, b3, *, tb=None,
                          bf16_activations=None):
    """x: (B, input_size) f32.  Weights in transposed (out, in) layout.

    Returns (B, 1) f32, matching the PyTorch module.
    """
    B, in_size = x.shape
    if bf16_activations is None:
        bf16_activations = _has_bf16_vpu()
    act_dtype = jnp.bfloat16 if bf16_activations else jnp.float32

    # ---- Batch tile selection -------------------------------------------
    # Lane-multiple padded batch.
    b_lane = int(pl.cdiv(B, 128)) * 128
    # Large default tile (amortizes the ~0.35us per-grid-step overhead); the
    # 4096 cap keeps the two (128, tb) temporaries + pipelined x/out buffers
    # well under v5e's 16 MiB scoped-VMEM default (<= ~4.5 MiB total).
    if tb is None:
        tb = 4096
    tb = max(128, (int(tb) // 128) * 128)
    tb = min(tb, b_lane)
    # Keep >= 2 grid steps when the padded batch allows it, so the "parallel"
    # batch axis shards across both TensorCores on v7x.
    if b_lane >= 256:
        tb = min(tb, max(128, ((b_lane // 2) // 128) * 128))
    b_pad = int(pl.cdiv(b_lane, tb)) * tb
    grid = (b_pad // tb,)

    # ---- Layout / dtype staging -----------------------------------------
    # Single pad + transpose pass, fused with the bf16 cast (halves the
    # staged-copy HBM traffic); allow_input_fusion below lets XLA fuse this
    # producer into the pallas_call input.
    x_t = jnp.pad(x.astype(jnp.bfloat16), ((0, b_pad - B), (0, 0))).T  # (in, b_pad)
    w1b = w1.astype(jnp.bfloat16)            # (128, in_size)
    w2b = w2.astype(jnp.bfloat16)            # (128, 128)
    w3r = w3.T.astype(jnp.bfloat16)          # (1, 128) row for the MXU dot
    b1c = b1.astype(act_dtype)               # (128, 1)
    b2c = b2.astype(act_dtype)               # (128, 1)

    out = pl.pallas_call(
        value_net_kernel,
        out_shape=jax.ShapeDtypeStruct((1, b_pad), jnp.float32),
        grid=grid,
        in_specs=[
            # Per-step pipelined batch tile of activations (bf16, lane-dense).
            pl.BlockSpec((in_size, tb), lambda i: (0, i)),
            # Weights / biases: constant index_map -> VMEM-resident, DMA'd once.
            pl.BlockSpec((HIDDEN, in_size), lambda i: (0, 0)),   # w1 (bf16)
            pl.BlockSpec((HIDDEN, 1),       lambda i: (0, 0)),   # b1 (act dtype)
            pl.BlockSpec((HIDDEN, HIDDEN),  lambda i: (0, 0)),   # w2 (bf16)
            pl.BlockSpec((HIDDEN, 1),       lambda i: (0, 0)),   # b2 (act dtype)
            pl.BlockSpec((1, HIDDEN),       lambda i: (0, 0)),   # w3 row (bf16)
            # Scalar bias lives in SMEM (no 128-lane VMEM padding).
            pl.BlockSpec(memory_space=pltpu.MemorySpace.SMEM),   # b3 (1,1) f32
        ],
        out_specs=pl.BlockSpec((1, tb), lambda i: (0, i)),       # lane-dense out
        compiler_params=pltpu.CompilerParams(
            dimension_semantics=("parallel",),                   # megacore on v7x
            allow_input_fusion=[True, False, False, False, False, False, False],
        ),
    )(x_t, w1b, b1c, w2b, b2c, w3r, b3)

    # Back to the PyTorch (B, 1) orientation, dropping batch padding.
    return out[:, :B].T


def reference_forward(x, w1, b1, w2, b2, w3, b3, bf16_activations):
    """Plain-JAX reference matching the kernel's dtype path exactly."""
    act = jnp.bfloat16 if bf16_activations else jnp.float32
    mm = jnp.bfloat16
    xt = x.astype(mm).T
    a1 = jnp.dot(w1.astype(mm), xt, preferred_element_type=jnp.float32)
    h1 = jnp.maximum(a1.astype(act) + b1.astype(act), 0).astype(mm)
    a2 = jnp.dot(w2.astype(mm), h1, preferred_element_type=jnp.float32)
    h2 = jnp.maximum(a2.astype(act) + b2.astype(act), 0).astype(mm)
    o = jnp.dot(w3.astype(mm).T, h2, preferred_element_type=jnp.float32) + b3[0, 0]
    return o.T  # (B, 1) f32


def init_params(key, input_size):
    """Synthetic init mirroring the PyTorch module, stored in (out, in) layout.

    Layers 1 & 2: nn.Linear default U(-1/sqrt(fan_in), 1/sqrt(fan_in)).
    Layer 3:      uniform_init -> U(-0.003, 0.003) for weight and bias.
    """
    k = jax.random.split(key, 6)
    bnd1 = 1.0 / (float(input_size) ** 0.5)
    bnd2 = 1.0 / (float(HIDDEN) ** 0.5)
    w1 = jax.random.uniform(k[0], (HIDDEN, input_size), jnp.float32, -bnd1, bnd1)
    b1 = jax.random.uniform(k[1], (HIDDEN, 1), jnp.float32, -bnd1, bnd1)
    w2 = jax.random.uniform(k[2], (HIDDEN, HIDDEN), jnp.float32, -bnd2, bnd2)
    b2 = jax.random.uniform(k[3], (HIDDEN, 1), jnp.float32, -bnd2, bnd2)
    w3 = jax.random.uniform(k[4], (HIDDEN, 1), jnp.float32, -0.003, 0.003)
    b3 = jax.random.uniform(k[5], (1, 1), jnp.float32, -0.003, 0.003)
    return w1, b1, w2, b2, w3, b3


if __name__ == "__main__":
    key = jax.random.PRNGKey(0)
    key_x, key_p = jax.random.split(key)

    batch = 8
    input_size = 4  # e.g. CartPole observation dim

    x = jax.random.normal(key_x, (batch, input_size), jnp.float32)
    params = init_params(key_p, input_size)
    use_bf16_act = _has_bf16_vpu()

    out = value_network_forward(x, *params, bf16_activations=use_bf16_act)
    out = jax.block_until_ready(out)
    assert out.shape == (batch, 1)

    # Primary check: dtype-faithful plain-JAX reference (tight tolerance).
    ref = reference_forward(x, *params, bf16_activations=use_bf16_act)
    assert jnp.allclose(out, ref, atol=1e-4, rtol=1e-3), "mismatch vs dtype-faithful ref"

    # Secondary sanity check vs full-f32 forward; outputs are ~1e-3 scale, so
    # use a small atol plus an rtol instead of a blanket 1e-2 atol.
    w1, b1, w2, b2, w3, b3 = params
    h1f = jnp.maximum(x @ w1.T + b1.T, 0.0)
    h2f = jnp.maximum(h1f @ w2.T + b2.T, 0.0)
    ref_f32 = h2f @ w3 + b3[0, 0]
    assert jnp.allclose(out, ref_f32, atol=1e-3, rtol=2e-2), "mismatch vs f32 ref"

    # Exercise a multi-tile, multi-core-shardable grid as well (tb forced small).
    x_big = jax.random.normal(key_x, (1000, input_size), jnp.float32)
    out_big = jax.block_until_ready(
        value_network_forward(x_big, *params, tb=256,
                              bf16_activations=use_bf16_act))
    ref_big = reference_forward(x_big, *params, bf16_activations=use_bf16_act)
    assert out_big.shape == (1000, 1)
    assert jnp.allclose(out_big, ref_big, atol=1e-4, rtol=1e-3), "mismatch on big batch"

    print("KERNEL_OK")
</pallas_src>

<mosaic_0001>
module attributes {stable_mosaic.version = 11 : i64} {
  func.func @value_net_kernel(%arg0: i32, %arg1: memref<4x128xbf16, #tpu.memory_space<vmem>>, %arg2: memref<128x4xbf16, #tpu.memory_space<vmem>>, %arg3: memref<128x1xbf16, #tpu.memory_space<vmem>>, %arg4: memref<128x128xbf16, #tpu.memory_space<vmem>>, %arg5: memref<128x1xbf16, #tpu.memory_space<vmem>>, %arg6: memref<1x128xbf16, #tpu.memory_space<vmem>>, %arg7: memref<1x1xf32, #tpu.memory_space<smem>>, %arg8: memref<1x128xf32, #tpu.memory_space<vmem>>) attributes {dimension_semantics = [#tpu.dimension_semantics<parallel>], iteration_bounds = array<i64: 1>, scalar_prefetch = 0 : i64, scratch_operands = 0 : i64, tpu.core_type = #tpu.core_type<tc>, window_params = [{transform_indices = @transform_0, window_bounds = array<i64: 4, 128>}, {pipeline_mode = #tpu.pipeline_mode<synchronous>, transform_indices = @transform_1, window_bounds = array<i64: 128, 4>}, {pipeline_mode = #tpu.pipeline_mode<synchronous>, transform_indices = @transform_2, window_bounds = array<i64: 128, 1>}, {pipeline_mode = #tpu.pipeline_mode<synchronous>, transform_indices = @transform_3, window_bounds = array<i64: 128, 128>}, {pipeline_mode = #tpu.pipeline_mode<synchronous>, transform_indices = @transform_4, window_bounds = array<i64: 128, 1>}, {pipeline_mode = #tpu.pipeline_mode<synchronous>, transform_indices = @transform_5, window_bounds = array<i64: 1, 128>}, {transform_indices = @transform_6, window_bounds = array<i64: 1, 1>}, {transform_indices = @transform_7, window_bounds = array<i64: 1, 128>}]} {
    %c0 = arith.constant 0 : index
    %c0_0 = arith.constant 0 : index
    %0 = vector.load %arg2[%c0, %c0_0] : memref<128x4xbf16, #tpu.memory_space<vmem>>, vector<128x4xbf16>
    %c0_1 = arith.constant 0 : index
    %c0_2 = arith.constant 0 : index
    %1 = vector.load %arg1[%c0_1, %c0_2] : memref<4x128xbf16, #tpu.memory_space<vmem>>, vector<4x128xbf16>
    %cst = arith.constant dense<0.000000e+00> : vector<128x128xf32>
    %2 = tpu.matmul %0, %1, %cst {dimension_numbers = #tpu.dot_dimension_numbers<[1], [0], [0], [1], [0, 0, 1, 1], [], []>} : vector<128x4xbf16>, vector<4x128xbf16>, vector<128x128xf32> -> vector<128x128xf32>
    %3 = arith.truncf %2 : vector<128x128xf32> to vector<128x128xbf16>
    %c0_3 = arith.constant 0 : index
    %c0_4 = arith.constant 0 : index
    %4 = vector.load %arg3[%c0_3, %c0_4] : memref<128x1xbf16, #tpu.memory_space<vmem>>, vector<128x1xbf16>
    %5 = vector.broadcast %4 : vector<128x1xbf16> to vector<128x128xbf16>
    %6 = arith.addf %3, %5 : vector<128x128xbf16>
    %cst_5 = arith.constant 0.000000e+00 : bf16
    %7 = vector.broadcast %cst_5 : bf16 to vector<128x128xbf16>
    %8 = arith.maximumf %6, %7 : vector<128x128xbf16>
    %c0_6 = arith.constant 0 : index
    %c0_7 = arith.constant 0 : index
    %9 = vector.load %arg4[%c0_6, %c0_7] : memref<128x128xbf16, #tpu.memory_space<vmem>>, vector<128x128xbf16>
    %cst_8 = arith.constant dense<0.000000e+00> : vector<128x128xf32>
    %10 = tpu.matmul %9, %8, %cst_8 {dimension_numbers = #tpu.dot_dimension_numbers<[1], [0], [0], [1], [0, 0, 1, 1], [], []>} : vector<128x128xbf16>, vector<128x128xbf16>, vector<128x128xf32> -> vector<128x128xf32>
    %11 = arith.truncf %10 : vector<128x128xf32> to vector<128x128xbf16>
    %c0_9 = arith.constant 0 : index
    %c0_10 = arith.constant 0 : index
    %12 = vector.load %arg5[%c0_9, %c0_10] : memref<128x1xbf16, #tpu.memory_space<vmem>>, vector<128x1xbf16>
    %13 = vector.broadcast %12 : vector<128x1xbf16> to vector<128x128xbf16>
    %14 = arith.addf %11, %13 : vector<128x128xbf16>
    %cst_11 = arith.constant 0.000000e+00 : bf16
    %15 = vector.broadcast %cst_11 : bf16 to vector<128x128xbf16>
    %16 = arith.maximumf %14, %15 : vector<128x128xbf16>
    %c0_12 = arith.constant 0 : index
    %c0_13 = arith.constant 0 : index
    %17 = vector.load %arg6[%c0_12, %c0_13] : memref<1x128xbf16, #tpu.memory_space<vmem>>, vector<1x128xbf16>
    %cst_14 = arith.constant dense<0.000000e+00> : vector<1x128xf32>
    %18 = tpu.matmul %17, %16, %cst_14 {dimension_numbers = #tpu.dot_dimension_numbers<[1], [0], [0], [1], [0, 0, 1, 1], [], []>} : vector<1x128xbf16>, vector<128x128xbf16>, vector<1x128xf32> -> vector<1x128xf32>
    %c0_15 = arith.constant 0 : index
    %c0_16 = arith.constant 0 : index
    %19 = memref.load %arg7[%c0_15, %c0_16] : memref<1x1xf32, #tpu.memory_space<smem>>
    %20 = vector.broadcast %19 : f32 to vector<1x128xf32>
    %21 = arith.addf %18, %20 : vector<1x128xf32>
    %c0_17 = arith.constant 0 : index
    %c0_18 = arith.constant 0 : index
    %22 = vector.load %arg8[%c0_17, %c0_18] : memref<1x128xf32, #tpu.memory_space<vmem>>, vector<1x128xf32>
    tpu.vector_store %arg8[%c0_17, %c0_18], %21 {strides = array<i32>} : memref<1x128xf32, #tpu.memory_space<vmem>>, vector<1x128xf32>,
    return
  }
  func.func @transform_0(%arg0: i32) -> (i32, i32) {
    %c0_i32 = arith.constant 0 : i32
    %c0_i32_0 = arith.constant 0 : i32
    return %c0_i32, %arg0 : i32, i32
  }
  func.func @transform_1(%arg0: i32) -> (i32, i32) {
    %c0_i32 = arith.constant 0 : i32
    %c0_i32_0 = arith.constant 0 : i32
    %c0_i32_1 = arith.constant 0 : i32
    return %c0_i32, %c0_i32_0 : i32, i32
  }
  func.func @transform_2(%arg0: i32) -> (i32, i32) {
    %c0_i32 = arith.constant 0 : i32
    %c0_i32_0 = arith.constant 0 : i32
    %c0_i32_1 = arith.constant 0 : i32
    return %c0_i32, %c0_i32_0 : i32, i32
  }
  func.func @transform_3(%arg0: i32) -> (i32, i32) {
    %c0_i32 = arith.constant 0 : i32
    %c0_i32_0 = arith.constant 0 : i32
    %c0_i32_1 = arith.constant 0 : i32
    return %c0_i32, %c0_i32_0 : i32, i32
  }
  func.func @transform_4(%arg0: i32) -> (i32, i32) {
    %c0_i32 = arith.constant 0 : i32
    %c0_i32_0 = arith.constant 0 : i32
    %c0_i32_1 = arith.constant 0 : i32
    return %c0_i32, %c0_i32_0 : i32, i32
  }
  func.func @transform_5(%arg0: i32) -> (i32, i32) {
    %c0_i32 = arith.constant 0 : i32
    %c0_i32_0 = arith.constant 0 : i32
    %c0_i32_1 = arith.constant 0 : i32
    return %c0_i32, %c0_i32_0 : i32, i32
  }
  func.func @transform_6(%arg0: i32) -> (i32, i32) {
    %c0_i32 = arith.constant 0 : i32
    %c0_i32_0 = arith.constant 0 : i32
    %c0_i32_1 = arith.constant 0 : i32
    return %c0_i32, %c0_i32_0 : i32, i32
  }
  func.func @transform_7(%arg0: i32) -> (i32, i32) {
    %c0_i32 = arith.constant 0 : i32
    %c0_i32_0 = arith.constant 0 : i32
    return %c0_i32, %arg0 : i32, i32
  }
}

</mosaic_0001>

<llo_original>
// kernel: tpu_custom_call.1
$region0: #{tpu_custom_call.1}
  #allocation0 [shape = 'u32[]', space=smem, size = 0x4, offset = 0x4, fixed_abs, tag = 'smem constant byte address 0x4 - core index']
  #allocation1 [shape = 'u32[144,128]{1,0:T(1,128)}', space=vmem, size = 0x12000, scoped, tag = 'internal scratch']
  #allocation2 [shape = 'f32[1,1]{1,0:T(1,128)S(6)}', space=smem, size = 0x200, scoped, tag = 'scoped memory for tpu_custom_call.1']
  %s0 = inlined_call_operand.vmem [shape: bf16[4,128], index: 0, kind: input, shape index: {}]
  %s1 = inlined_call_operand.vmem [shape: bf16[128,4], index: 1, kind: input, shape index: {}]
  %s2 = inlined_call_operand.vmem [shape: bf16[128,1], index: 2, kind: input, shape index: {}]
  %s3 = inlined_call_operand.vmem [shape: bf16[128,128], index: 3, kind: input, shape index: {}]
  %s4 = inlined_call_operand.vmem [shape: bf16[128,1], index: 4, kind: input, shape index: {}]
  %s5 = inlined_call_operand.vmem [shape: bf16[1,128], index: 5, kind: input, shape index: {}]
  %s6 = inlined_call_operand.<no memory space> [shape: f32[1,1], index: 6, kind: input, shape index: {}]
  %s7 = inlined_call_operand.hbm [shape: f32[1,128], index: 7, kind: output, shape index: {}]
  %s8 = sld [smem:[#allocation0]]
  $region38: #{tpu_custom_call.1} parent=0
    _
  %s10 = ssub.s32 1, %s8
  %s11 = scalar_select 0, %s10, %s8
  %12 = sst [smem:[#allocation2]] %s6
  $region1: #{tpu_custom_call.1} parent=0
    #allocation3 [shape = 'u8[512]{0}', space=vmem, size = 0x400, scoped, tag = 'output window, operand 0, single buffered']
    #allocation4 [shape = 's32[1]{0}', space=sflag, size = 0x4, scoped, tag = 'scoped memory for tpu_custom_call.1']
    %13 = vsyncpa [#allocation4], 0
    // Predicated region
    $region2: #{tpu_custom_call.1} parent=1 // pred_check
      _
    $region3: #{tpu_custom_call.1} parent=1 // pred_check_branch
      %15 = sbr.rel (0) target = $region5
    $region4: #{tpu_custom_call.1} parent=1 // pred_region
      _
    $region5: #{tpu_custom_call.1} parent=1 // pred_fallthru
      _
    // Predicated region
    $region6: #{tpu_custom_call.1} parent=1 // pred_check
      _
    $region7: #{tpu_custom_call.1} parent=1 // pred_check_branch
      %17 = sbr.rel (0) target = $region9
    $region8: #{tpu_custom_call.1} parent=1 // pred_region
      _
    $region9: #{tpu_custom_call.1} parent=1 // pred_fallthru
      _
    // Predicated region
    $region10: #{tpu_custom_call.1} parent=1 // pred_check
      _
    $region11: #{tpu_custom_call.1} parent=1 // pred_check_branch
      %19 = sbr.rel (0) target = $region13
    $region12: #{tpu_custom_call.1} parent=1 // pred_region
      _
    $region13: #{tpu_custom_call.1} parent=1 // pred_fallthru
      _
    // Predicated region
    $region14: #{tpu_custom_call.1} parent=1 // pred_check
      _
    $region15: #{tpu_custom_call.1} parent=1 // pred_check_branch
      %21 = sbr.rel (0) target = $region17
    $region16: #{tpu_custom_call.1} parent=1 // pred_region
      _
    $region17: #{tpu_custom_call.1} parent=1 // pred_fallthru
      _
    // Predicated region
    $region18: #{tpu_custom_call.1} parent=1 // pred_check
      _
    $region19: #{tpu_custom_call.1} parent=1 // pred_check_branch
      %23 = sbr.rel (0) target = $region21
    $region20: #{tpu_custom_call.1} parent=1 // pred_region
      _
    $region21: #{tpu_custom_call.1} parent=1 // pred_fallthru
      _
    // Predicated region
    $region22: #{tpu_custom_call.1} parent=1 // pred_check
      _
    $region23: #{tpu_custom_call.1} parent=1 // pred_check_branch
      %25 = sbr.rel (0) target = $region25
    $region24: #{tpu_custom_call.1} parent=1 // pred_region
      _
    $region25: #{tpu_custom_call.1} parent=1 // pred_fallthru
      _
    // Predicated region
    $region26: #{tpu_custom_call.1} parent=1 // pred_check
      _
    $region27: #{tpu_custom_call.1} parent=1 // pred_check_branch
      %27 = sbr.rel (0) target = $region29
    $region28: #{tpu_custom_call.1} parent=1 // pred_region
      _
    $region29: #{tpu_custom_call.1} parent=1 // pred_fallthru
      _
    %v29 = vld [vmem:[%s1] sm:$0xf]
    %v30 = vld [vmem:[%s1 + $0x4] sm:$0xf]
    %v31 = vld [vmem:[%s1 + $0x8] sm:$0xf]
    %v32 = vld [vmem:[%s1 + $0xc] sm:$0xf]
    %v33 = vld [vmem:[%s1 + $0x10] sm:$0xf]
    %v34 = vld [vmem:[%s1 + $0x14] sm:$0xf]
    %v35 = vld [vmem:[%s1 + $0x18] sm:$0xf]
    %v36 = vld [vmem:[%s1 + $0x1c] sm:$0xf]
    %v37 = vld [vmem:[%s1 + $0x20] sm:$0xf]
    %v38 = vld [vmem:[%s1 + $0x24] sm:$0xf]
    %v39 = vld [vmem:[%s1 + $0x28] sm:$0xf]
    %v40 = vld [vmem:[%s1 + $0x2c] sm:$0xf]
    %v41 = vld [vmem:[%s1 + $0x30] sm:$0xf]
    %v42 = vld [vmem:[%s1 + $0x34] sm:$0xf]
    %v43 = vld [vmem:[%s1 + $0x38] sm:$0xf]
    %v44 = vld [vmem:[%s1 + $0x3c] sm:$0xf]
    %v45 = vld [vmem:[%s0] sm:$0x3]
    %v62 = vunpack.c.l.b16 %v29
    %v63 = vunpack.c.l.b16 %v30
    %v64 = vunpack.c.l.b16 %v31
    %v65 = vunpack.c.l.b16 %v32
    %v66 = vunpack.c.l.b16 %v33
    %v67 = vunpack.c.l.b16 %v34
    %v68 = vunpack.c.l.b16 %v35
    %v69 = vunpack.c.l.b16 %v36
    %v70 = vunpack.c.l.b16 %v37
    %v71 = vunpack.c.l.b16 %v38
    %v72 = vunpack.c.l.b16 %v39
    %v73 = vunpack.c.l.b16 %v40
    %v74 = vunpack.c.l.b16 %v41
    %v75 = vunpack.c.l.b16 %v42
    %v76 = vunpack.c.l.b16 %v43
    %v77 = vunpack.c.l.b16 %v44
    %v78 = vpack.c.b16 %v63, %v62
    %v79 = vpack.c.b16 %v65, %v64
    %v80 = vpack.c.b16 %v67, %v66
    %v81 = vpack.c.b16 %v69, %v68
    %v82 = vpack.c.b16 %v71, %v70
    %v83 = vpack.c.b16 %v73, %v72
    %v84 = vpack.c.b16 %v75, %v74
    %v85 = vpack.c.b16 %v77, %v76
    %vm86 = vcmask 31744
    %v88 = vsel %vm86, %v78, 0
    %v91 = vsel %vm86, %v79, 0
    %v94 = vsel %vm86, %v80, 0
    %v97 = vsel %vm86, %v81, 0
    %v100 = vsel %vm86, %v82, 0
    %v103 = vsel %vm86, %v83, 0
    %v106 = vsel %vm86, %v84, 0
    %v109 = vsel %vm86, %v85, 0
    %vm111 = vcmask 1041408
    %v113 = vsel %vm111, %v45, 0
    %115 = vmatprep.subr.bf16.mxu0 0
    %116 = vmatpush1.bf16.msra.mxu0 %v113
    %117 = vmatprep.subr.bf16.mxu0 0
    %118 = vmatpush1.bf16.msra.mxu0 0
    %119 = vmatprep.subr.bf16.mxu0 0
    %120 = vmatpush1.bf16.msra.mxu0 0
    %121 = vmatprep.subr.bf16.mxu0 0
    %122 = vmatpush1.bf16.msra.mxu0 0
    %123 = vmatprep.subr.bf16.mxu0 0
    %124 = vmatpush1.bf16.msra.mxu0 0
    %125 = vmatprep.subr.bf16.mxu0 0
    %126 = vmatpush1.bf16.msra.mxu0 0
    %127 = vmatprep.subr.bf16.mxu0 0
    %128 = vmatpush1.bf16.msra.mxu0 0
    %129 = vmatprep.subr.bf16.mxu0 0
    %130 = vmatpush1.bf16.msra.mxu0 0
    %131 = vmatprep.subr.bf16.mxu0 0
    %132 = vmatpush1.bf16.msra.mxu0 0
    %133 = vmatprep.subr.bf16.mxu0 0
    %134 = vmatpush1.bf16.msra.mxu0 0
    %135 = vmatprep.subr.bf16.mxu0 0
    %136 = vmatpush1.bf16.msra.mxu0 0
    %137 = vmatprep.subr.bf16.mxu0 0
    %138 = vmatpush1.bf16.msra.mxu0 0
    %139 = vmatprep.subr.bf16.mxu0 0
    %140 = vmatpush1.bf16.msra.mxu0 0
    %141 = vmatprep.subr.bf16.mxu0 0
    %142 = vmatpush1.bf16.msra.mxu0 0
    %143 = vmatprep.subr.bf16.mxu0 0
    %144 = vmatpush1.bf16.msra.mxu0 0
    %145 = vmatprep.subr.bf16.mxu0 0
    %146 = vmatpush1.bf16.msra.mxu0 0
    %147 = vmatprep.mubr.bf16.mxu0 0
    %148 = vmatmul.mubr.bf16.gmra.mrb[0].mxu0 %v88
    %v149 = vpop.f32.mrb[0].mxu0
    %v150 = vadd.f32 0.0, %v149
    %v151 = vpop.f32.mrb[0].mxu0
    %v152 = vpop.f32.mrb[0].mxu0
    %v153 = vadd.f32 0.0, %v152
    %v154 = vpop.f32.mrb[0].mxu0
    %155 = vmatprep.mubr.bf16.mxu0 0
    %156 = vmatmul.mubr.bf16.gmra.mrb[0].mxu0 %v91
    %v157 = vpop.f32.mrb[0].mxu0
    %v158 = vadd.f32 0.0, %v157
    %v159 = vpop.f32.mrb[0].mxu0
    %v160 = vpop.f32.mrb[0].mxu0
    %v161 = vadd.f32 0.0, %v160
    %v162 = vpop.f32.mrb[0].mxu0
    %163 = vmatprep.mubr.bf16.mxu0 0
    %164 = vmatmul.mubr.bf16.gmra.mrb[0].mxu0 %v94
    %v165 = vpop.f32.mrb[0].mxu0
    %v166 = vadd.f32 0.0, %v165
    %v167 = vpop.f32.mrb[0].mxu0
    %v168 = vpop.f32.mrb[0].mxu0
    %v169 = vadd.f32 0.0, %v168
    %v170 = vpop.f32.mrb[0].mxu0
    %171 = vmatprep.mubr.bf16.mxu0 0
    %172 = vmatmul.mubr.bf16.gmra.mrb[0].mxu0 %v97
    %v173 = vpop.f32.mrb[0].mxu0
    %v174 = vadd.f32 0.0, %v173
    %v175 = vpop.f32.mrb[0].mxu0
    %v176 = vpop.f32.mrb[0].mxu0
    %v177 = vadd.f32 0.0, %v176
    %v178 = vpop.f32.mrb[0].mxu0
    %179 = vmatprep.mubr.bf16.mxu0 0
    %180 = vmatmul.mubr.bf16.gmra.mrb[0].mxu0 %v100
    %v181 = vpop.f32.mrb[0].mxu0
    %v182 = vadd.f32 0.0, %v181
    %v183 = vpop.f32.mrb[0].mxu0
    %v184 = vpop.f32.mrb[0].mxu0
    %v185 = vadd.f32 0.0, %v184
    %v186 = vpop.f32.mrb[0].mxu0
    %187 = vmatprep.mubr.bf16.mxu0 0
    %188 = vmatmul.mubr.bf16.gmra.mrb[0].mxu0 %v103
    %v189 = vpop.f32.mrb[0].mxu0
    %v190 = vadd.f32 0.0, %v189
    %v191 = vpop.f32.mrb[0].mxu0
    %v192 = vpop.f32.mrb[0].mxu0
    %v193 = vadd.f32 0.0, %v192
    %v194 = vpop.f32.mrb[0].mxu0
    %195 = vmatprep.mubr.bf16.mxu0 0
    %196 = vmatmul.mubr.bf16.gmra.mrb[0].mxu0 %v106
    %v197 = vpop.f32.mrb[0].mxu0
    %v198 = vadd.f32 0.0, %v197
    %v199 = vpop.f32.mrb[0].mxu0
    %v200 = vpop.f32.mrb[0].mxu0
    %v201 = vadd.f32 0.0, %v200
    %v202 = vpop.f32.mrb[0].mxu0
    %203 = vmatprep.mubr.bf16.mxu0 0
    %204 = vmatmul.mubr.bf16.gmra.mrb[0].mxu0 %v109
    %v205 = vpop.f32.mrb[0].mxu0
    %v206 = vadd.f32 0.0, %v205
    %v207 = vpop.f32.mrb[0].mxu0
    %v208 = vpop.f32.mrb[0].mxu0
    %v209 = vadd.f32 0.0, %v208
    %v210 = vpop.f32.mrb[0].mxu0
    %211 = vdwg.mxu0
    %v212 = vpack.c.bf16 %v153, %v150
    %v213 = vpack.c.bf16 %v161, %v158
    %v214 = vpack.c.bf16 %v169, %v166
    %v215 = vpack.c.bf16 %v177, %v174
    %v216 = vpack.c.bf16 %v185, %v182
    %v217 = vpack.c.bf16 %v193, %v190
    %v218 = vpack.c.bf16 %v201, %v198
    %v219 = vpack.c.bf16 %v209, %v206
    %v220 = vld [vmem:[%s2] sm:$0xf]
    %v221 = vld [vmem:[%s2 + $0x4] sm:$0xf]
    %v222 = vld [vmem:[%s2 + $0x8] sm:$0xf]
    %v223 = vld [vmem:[%s2 + $0xc] sm:$0xf]
    %v224 = vld [vmem:[%s2 + $0x10] sm:$0xf]
    %v225 = vld [vmem:[%s2 + $0x14] sm:$0xf]
    %v226 = vld [vmem:[%s2 + $0x18] sm:$0xf]
    %v227 = vld [vmem:[%s2 + $0x1c] sm:$0xf]
    %v228 = vld [vmem:[%s2 + $0x20] sm:$0xf]
    %v229 = vld [vmem:[%s2 + $0x24] sm:$0xf]
    %v230 = vld [vmem:[%s2 + $0x28] sm:$0xf]
    %v231 = vld [vmem:[%s2 + $0x2c] sm:$0xf]
    %v232 = vld [vmem:[%s2 + $0x30] sm:$0xf]
    %v233 = vld [vmem:[%s2 + $0x34] sm:$0xf]
    %v234 = vld [vmem:[%s2 + $0x38] sm:$0xf]
    %v235 = vld [vmem:[%s2 + $0x3c] sm:$0xf]
    %237 = vset.pattern.permute.xlu0 0
    %238 = vperm.xlu0 %237, %v220
    %v239 = vpop.permute.xlu0 %238
    %v242 = vunpack.c.l.s4 839922192
    %v243 = vunpack.c.0.s8 %v242
    %v244 = vlaneseq
    %v245 = vshrl.u32 %v244, 7
    %v246 = vsub.s32 %v243, %v245
    %v247 = vrot.slane %v239, %v246
    %249 = vset.pattern.permute.xlu0 0
    %250 = vperm.xlu0 %249, %v221
    %v251 = vpop.permute.xlu0 %250
    %v254 = vunpack.c.l.s4 839922192
    %v255 = vunpack.c.0.s8 %v254
    %v256 = vlaneseq
    %v257 = vshrl.u32 %v256, 7
    %v258 = vsub.s32 %v255, %v257
    %v259 = vrot.slane %v251, %v258
    %261 = vset.pattern.permute.xlu0 0
    %262 = vperm.xlu0 %261, %v222
    %v263 = vpop.permute.xlu0 %262
    %v266 = vunpack.c.l.s4 839922192
    %v267 = vunpack.c.0.s8 %v266
    %v268 = vlaneseq
    %v269 = vshrl.u32 %v268, 7
    %v270 = vsub.s32 %v267, %v269
    %v271 = vrot.slane %v263, %v270
    %273 = vset.pattern.permute.xlu0 0
    %274 = vperm.xlu0 %273, %v223
    %v275 = vpop.permute.xlu0 %274
    %v278 = vunpack.c.l.s4 839922192
    %v279 = vunpack.c.0.s8 %v278
    %v280 = vlaneseq
    %v281 = vshrl.u32 %v280, 7
    %v282 = vsub.s32 %v279, %v281
    %v283 = vrot.slane %v275, %v282
    %285 = vset.pattern.permute.xlu0 0
    %286 = vperm.xlu0 %285, %v224
    %v287 = vpop.permute.xlu0 %286
    %v290 = vunpack.c.l.s4 839922192
    %v291 = vunpack.c.0.s8 %v290
    %v292 = vlaneseq
    %v293 = vshrl.u32 %v292, 7
    %v294 = vsub.s32 %v291, %v293
    %v295 = vrot.slane %v287, %v294
    %297 = vset.pattern.permute.xlu0 0
    %298 = vperm.xlu0 %297, %v225
    %v299 = vpop.permute.xlu0 %298
    %v302 = vunpack.c.l.s4 839922192
    %v303 = vunpack.c.0.s8 %v302
    %v304 = vlaneseq
    %v305 = vshrl.u32 %v304, 7
    %v306 = vsub.s32 %v303, %v305
    %v307 = vrot.slane %v299, %v306
    %309 = vset.pattern.permute.xlu0 0
    %310 = vperm.xlu0 %309, %v226
    %v311 = vpop.permute.xlu0 %310
    %v314 = vunpack.c.l.s4 839922192
    %v315 = vunpack.c.0.s8 %v314
    %v316 = vlaneseq
    %v317 = vshrl.u32 %v316, 7
    %v318 = vsub.s32 %v315, %v317
    %v319 = vrot.slane %v311, %v318
    %321 = vset.pattern.permute.xlu0 0
    %322 = vperm.xlu0 %321, %v227
    %v323 = vpop.permute.xlu0 %322
    %v326 = vunpack.c.l.s4 839922192
    %v327 = vunpack.c.0.s8 %v326
    %v328 = vlaneseq
    %v329 = vshrl.u32 %v328, 7
    %v330 = vsub.s32 %v327, %v329
    %v331 = vrot.slane %v323, %v330
    %333 = vset.pattern.permute.xlu0 0
    %334 = vperm.xlu0 %333, %v228
    %v335 = vpop.permute.xlu0 %334
    %v338 = vunpack.c.l.s4 839922192
    %v339 = vunpack.c.0.s8 %v338
    %v340 = vlaneseq
    %v341 = vshrl.u32 %v340, 7
    %v342 = vsub.s32 %v339, %v341
    %v343 = vrot.slane %v335, %v342
    %345 = vset.pattern.permute.xlu0 0
    %346 = vperm.xlu0 %345, %v229
    %v347 = vpop.permute.xlu0 %346
    %v350 = vunpack.c.l.s4 839922192
    %v351 = vunpack.c.0.s8 %v350
    %v352 = vlaneseq
    %v353 = vshrl.u32 %v352, 7
    %v354 = vsub.s32 %v351, %v353
    %v355 = vrot.slane %v347, %v354
    %357 = vset.pattern.permute.xlu0 0
    %358 = vperm.xlu0 %357, %v230
    %v359 = vpop.permute.xlu0 %358
    %v362 = vunpack.c.l.s4 839922192
    %v363 = vunpack.c.0.s8 %v362
    %v364 = vlaneseq
    %v365 = vshrl.u32 %v364, 7
    %v366 = vsub.s32 %v363, %v365
    %v367 = vrot.slane %v359, %v366
    %369 = vset.pattern.permute.xlu0 0
    %370 = vperm.xlu0 %369, %v231
    %v371 = vpop.permute.xlu0 %370
    %v374 = vunpack.c.l.s4 839922192
    %v375 = vunpack.c.0.s8 %v374
    %v376 = vlaneseq
    %v377 = vshrl.u32 %v376, 7
    %v378 = vsub.s32 %v375, %v377
    %v379 = vrot.slane %v371, %v378
    %381 = vset.pattern.permute.xlu0 0
    %382 = vperm.xlu0 %381, %v232
    %v383 = vpop.permute.xlu0 %382
    %v386 = vunpack.c.l.s4 839922192
    %v387 = vunpack.c.0.s8 %v386
    %v388 = vlaneseq
    %v389 = vshrl.u32 %v388, 7
    %v390 = vsub.s32 %v387, %v389
    %v391 = vrot.slane %v383, %v390
    %393 = vset.pattern.permute.xlu0 0
    %394 = vperm.xlu0 %393, %v233
    %v395 = vpop.permute.xlu0 %394
    %v398 = vunpack.c.l.s4 839922192
    %v399 = vunpack.c.0.s8 %v398
    %v400 = vlaneseq
    %v401 = vshrl.u32 %v400, 7
    %v402 = vsub.s32 %v399, %v401
    %v403 = vrot.slane %v395, %v402
    %405 = vset.pattern.permute.xlu0 0
    %406 = vperm.xlu0 %405, %v234
    %v407 = vpop.permute.xlu0 %406
    %v410 = vunpack.c.l.s4 839922192
    %v411 = vunpack.c.0.s8 %v410
    %v412 = vlaneseq
    %v413 = vshrl.u32 %v412, 7
    %v414 = vsub.s32 %v411, %v413
    %v415 = vrot.slane %v407, %v414
    %417 = vset.pattern.permute.xlu0 0
    %418 = vperm.xlu0 %417, %v235
    %v419 = vpop.permute.xlu0 %418
    %v422 = vunpack.c.l.s4 839922192
    %v423 = vunpack.c.0.s8 %v422
    %v424 = vlaneseq
    %v425 = vshrl.u32 %v424, 7
    %v426 = vsub.s32 %v423, %v425
    %v427 = vrot.slane %v419, %v426
    %v444 = vunpack.c.l.b16 %v247
    %v445 = vunpack.c.l.b16 %v259
    %v446 = vunpack.c.l.b16 %v271
    %v447 = vunpack.c.l.b16 %v283
    %v448 = vunpack.c.l.b16 %v295
    %v449 = vunpack.c.l.b16 %v307
    %v450 = vunpack.c.l.b16 %v319
    %v451 = vunpack.c.l.b16 %v331
    %v452 = vunpack.c.l.b16 %v343
    %v453 = vunpack.c.l.b16 %v355
    %v454 = vunpack.c.l.b16 %v367
    %v455 = vunpack.c.l.b16 %v379
    %v456 = vunpack.c.l.b16 %v391
    %v457 = vunpack.c.l.b16 %v403
    %v458 = vunpack.c.l.b16 %v415
    %v459 = vunpack.c.l.b16 %v427
    %v460 = vpack.c.b16 %v445, %v444
    %v461 = vpack.c.b16 %v447, %v446
    %v462 = vpack.c.b16 %v449, %v448
    %v463 = vpack.c.b16 %v451, %v450
    %v464 = vpack.c.b16 %v453, %v452
    %v465 = vpack.c.b16 %v455, %v454
    %v466 = vpack.c.b16 %v457, %v456
    %v467 = vpack.c.b16 %v459, %v458
    %v476 = vadd.bf16 %v212, %v460
    %v477 = vadd.bf16 %v213, %v461
    %v478 = vadd.bf16 %v214, %v462
    %v479 = vadd.bf16 %v215, %v463
    %v480 = vadd.bf16 %v216, %v464
    %v481 = vadd.bf16 %v217, %v465
    %v482 = vadd.bf16 %v218, %v466
    %v483 = vadd.bf16 %v219, %v467
    %v484 = vmax.bf16 %v476, 0
    %v485 = vmax.bf16 %v477, 0
    %v486 = vmax.bf16 %v478, 0
    %v487 = vmax.bf16 %v479, 0
    %v488 = vmax.bf16 %v480, 0
    %v489 = vmax.bf16 %v481, 0
    %v490 = vmax.bf16 %v482, 0
    %v491 = vmax.bf16 %v483, 0
    %v492 = vld [vmem:[%s3] sm:$0xf]
    %v493 = vld [vmem:[%s3 + $0x4] sm:$0xf]
    %v494 = vld [vmem:[%s3 + $0x8] sm:$0xf]
    %v495 = vld [vmem:[%s3 + $0xc] sm:$0xf]
    %v496 = vld [vmem:[%s3 + $0x10] sm:$0xf]
    %v497 = vld [vmem:[%s3 + $0x14] sm:$0xf]
    %v498 = vld [vmem:[%s3 + $0x18] sm:$0xf]
    %v499 = vld [vmem:[%s3 + $0x1c] sm:$0xf]
    %v500 = vld [vmem:[%s3 + $0x20] sm:$0xf]
    %v501 = vld [vmem:[%s3 + $0x24] sm:$0xf]
    %v502 = vld [vmem:[%s3 + $0x28] sm:$0xf]
    %v503 = vld [vmem:[%s3 + $0x2c] sm:$0xf]
    %v504 = vld [vmem:[%s3 + $0x30] sm:$0xf]
    %v505 = vld [vmem:[%s3 + $0x34] sm:$0xf]
    %v506 = vld [vmem:[%s3 + $0x38] sm:$0xf]
    %v507 = vld [vmem:[%s3 + $0x3c] sm:$0xf]
    %v524 = vunpack.c.l.b16 %v492
    %v525 = vunpack.c.l.b16 %v493
    %v526 = vunpack.c.l.b16 %v494
    %v527 = vunpack.c.l.b16 %v495
    %v528 = vunpack.c.l.b16 %v496
    %v529 = vunpack.c.l.b16 %v497
    %v530 = vunpack.c.l.b16 %v498
    %v531 = vunpack.c.l.b16 %v499
    %v532 = vunpack.c.l.b16 %v500
    %v533 = vunpack.c.l.b16 %v501
    %v534 = vunpack.c.l.b16 %v502
    %v535 = vunpack.c.l.b16 %v503
    %v536 = vunpack.c.l.b16 %v504
    %v537 = vunpack.c.l.b16 %v505
    %v538 = vunpack.c.l.b16 %v506
    %v539 = vunpack.c.l.b16 %v507
    %v540 = vpack.c.b16 %v525, %v524
    %v541 = vpack.c.b16 %v527, %v526
    %v542 = vpack.c.b16 %v529, %v528
    %v543 = vpack.c.b16 %v531, %v530
    %v544 = vpack.c.b16 %v533, %v532
    %v545 = vpack.c.b16 %v535, %v534
    %v546 = vpack.c.b16 %v537, %v536
    %v547 = vpack.c.b16 %v539, %v538
    %556 = vmatprep.subr.bf16.mxu0 0
    %557 = vmatpush1.bf16.msra.mxu0 %v484
    %558 = vmatprep.subr.bf16.mxu0 0
    %559 = vmatpush1.bf16.msra.mxu0 %v485
    %560 = vmatprep.subr.bf16.mxu0 0
    %561 = vmatpush1.bf16.msra.mxu0 %v486
    %562 = vmatprep.subr.bf16.mxu0 0
    %563 = vmatpush1.bf16.msra.mxu0 %v487
    %564 = vmatprep.subr.bf16.mxu0 0
    %565 = vmatpush1.bf16.msra.mxu0 %v488
    %566 = vmatprep.subr.bf16.mxu0 0
    %567 = vmatpush1.bf16.msra.mxu0 %v489
    %568 = vmatprep.subr.bf16.mxu0 0
    %569 = vmatpush1.bf16.msra.mxu0 %v490
    %570 = vmatprep.subr.bf16.mxu0 0
    %571 = vmatpush1.bf16.msra.mxu0 %v491
    %572 = vmatprep.subr.bf16.mxu0 0
    %573 = vmatpush1.bf16.msra.mxu0 0
    %574 = vmatprep.subr.bf16.mxu0 0
    %575 = vmatpush1.bf16.msra.mxu0 0
    %576 = vmatprep.subr.bf16.mxu0 0
    %577 = vmatpush1.bf16.msra.mxu0 0
    %578 = vmatprep.subr.bf16.mxu0 0
    %579 = vmatpush1.bf16.msra.mxu0 0
    %580 = vmatprep.subr.bf16.mxu0 0
    %581 = vmatpush1.bf16.msra.mxu0 0
    %582 = vmatprep.subr.bf16.mxu0 0
    %583 = vmatpush1.bf16.msra.mxu0 0
    %584 = vmatprep.subr.bf16.mxu0 0
    %585 = vmatpush1.bf16.msra.mxu0 0
    %586 = vmatprep.subr.bf16.mxu0 0
    %587 = vmatpush1.bf16.msra.mxu0 0
    %588 = vmatprep.mubr.bf16.mxu0 0
    %589 = vmatmul.mubr.bf16.gmra.mrb[0].mxu0 %v540
    %v590 = vpop.f32.mrb[0].mxu0
    %v591 = vadd.f32 0.0, %v590
    %v592 = vpop.f32.mrb[0].mxu0
    %v593 = vpop.f32.mrb[0].mxu0
    %v594 = vadd.f32 0.0, %v593
    %v595 = vpop.f32.mrb[0].mxu0
    %596 = vmatprep.mubr.bf16.mxu0 0
    %597 = vmatmul.mubr.bf16.gmra.mrb[0].mxu0 %v541
    %v598 = vpop.f32.mrb[0].mxu0
    %v599 = vadd.f32 0.0, %v598
    %v600 = vpop.f32.mrb[0].mxu0
    %v601 = vpop.f32.mrb[0].mxu0
    %v602 = vadd.f32 0.0, %v601
    %v603 = vpop.f32.mrb[0].mxu0
    %604 = vmatprep.mubr.bf16.mxu0 0
    %605 = vmatmul.mubr.bf16.gmra.mrb[0].mxu0 %v542
    %v606 = vpop.f32.mrb[0].mxu0
    %v607 = vadd.f32 0.0, %v606
    %v608 = vpop.f32.mrb[0].mxu0
    %v609 = vpop.f32.mrb[0].mxu0
    %v610 = vadd.f32 0.0, %v609
    %v611 = vpop.f32.mrb[0].mxu0
    %612 = vmatprep.mubr.bf16.mxu0 0
    %613 = vmatmul.mubr.bf16.gmra.mrb[0].mxu0 %v543
    %v614 = vpop.f32.mrb[0].mxu0
    %v615 = vadd.f32 0.0, %v614
    %v616 = vpop.f32.mrb[0].mxu0
    %v617 = vpop.f32.mrb[0].mxu0
    %v618 = vadd.f32 0.0, %v617
    %v619 = vpop.f32.mrb[0].mxu0
    %620 = vmatprep.mubr.bf16.mxu0 0
    %621 = vmatmul.mubr.bf16.gmra.mrb[0].mxu0 %v544
    %v622 = vpop.f32.mrb[0].mxu0
    %v623 = vadd.f32 0.0, %v622
    %v624 = vpop.f32.mrb[0].mxu0
    %v625 = vpop.f32.mrb[0].mxu0
    %v626 = vadd.f32 0.0, %v625
    %v627 = vpop.f32.mrb[0].mxu0
    %628 = vmatprep.mubr.bf16.mxu0 0
    %629 = vmatmul.mubr.bf16.gmra.mrb[0].mxu0 %v545
    %v630 = vpop.f32.mrb[0].mxu0
    %v631 = vadd.f32 0.0, %v630
    %v632 = vpop.f32.mrb[0].mxu0
    %v633 = vpop.f32.mrb[0].mxu0
    %v634 = vadd.f32 0.0, %v633
    %v635 = vpop.f32.mrb[0].mxu0
    %636 = vmatprep.mubr.bf16.mxu0 0
    %637 = vmatmul.mubr.bf16.gmra.mrb[0].mxu0 %v546
    %v638 = vpop.f32.mrb[0].mxu0
    %v639 = vadd.f32 0.0, %v638
    %v640 = vpop.f32.mrb[0].mxu0
    %v641 = vpop.f32.mrb[0].mxu0
    %v642 = vadd.f32 0.0, %v641
    %v643 = vpop.f32.mrb[0].mxu0
    %644 = vmatprep.mubr.bf16.mxu0 0
    %645 = vmatmul.mubr.bf16.gmra.mrb[0].mxu0 %v547
    %v646 = vpop.f32.mrb[0].mxu0
    %v647 = vadd.f32 0.0, %v646
    %v648 = vpop.f32.mrb[0].mxu0
    %v649 = vpop.f32.mrb[0].mxu0
    %v650 = vadd.f32 0.0, %v649
    %v651 = vpop.f32.mrb[0].mxu0
    %652 = vdwg.mxu0
    %v653 = vpack.c.bf16 %v594, %v591
    %v654 = vpack.c.bf16 %v602, %v599
    %v655 = vpack.c.bf16 %v610, %v607
    %v656 = vpack.c.bf16 %v618, %v615
    %v657 = vpack.c.bf16 %v626, %v623
    %v658 = vpack.c.bf16 %v634, %v631
    %v659 = vpack.c.bf16 %v642, %v639
    %v660 = vpack.c.bf16 %v650, %v647
    %v661 = vld [vmem:[%s4] sm:$0xf]
    %v662 = vld [vmem:[%s4 + $0x4] sm:$0xf]
    %v663 = vld [vmem:[%s4 + $0x8] sm:$0xf]
    %v664 = vld [vmem:[%s4 + $0xc] sm:$0xf]
    %v665 = vld [vmem:[%s4 + $0x10] sm:$0xf]
    %v666 = vld [vmem:[%s4 + $0x14] sm:$0xf]
    %v667 = vld [vmem:[%s4 + $0x18] sm:$0xf]
    %v668 = vld [vmem:[%s4 + $0x1c] sm:$0xf]
    %v669 = vld [vmem:[%s4 + $0x20] sm:$0xf]
    %v670 = vld [vmem:[%s4 + $0x24] sm:$0xf]
    %v671 = vld [vmem:[%s4 + $0x28] sm:$0xf]
    %v672 = vld [vmem:[%s4 + $0x2c] sm:$0xf]
    %v673 = vld [vmem:[%s4 + $0x30] sm:$0xf]
    %v674 = vld [vmem:[%s4 + $0x34] sm:$0xf]
    %v675 = vld [vmem:[%s4 + $0x38] sm:$0xf]
    %v676 = vld [vmem:[%s4 + $0x3c] sm:$0xf]
    %678 = vset.pattern.permute.xlu0 0
    %679 = vperm.xlu0 %678, %v661
    %v680 = vpop.permute.xlu0 %679
    %v683 = vunpack.c.l.s4 839922192
    %v684 = vunpack.c.0.s8 %v683
    %v685 = vlaneseq
    %v686 = vshrl.u32 %v685, 7
    %v687 = vsub.s32 %v684, %v686
    %v688 = vrot.slane %v680, %v687
    %690 = vset.pattern.permute.xlu0 0
    %691 = vperm.xlu0 %690, %v662
    %v692 = vpop.permute.xlu0 %691
    %v695 = vunpack.c.l.s4 839922192
    %v696 = vunpack.c.0.s8 %v695
    %v697 = vlaneseq
    %v698 = vshrl.u32 %v697, 7
    %v699 = vsub.s32 %v696, %v698
    %v700 = vrot.slane %v692, %v699
    %702 = vset.pattern.permute.xlu0 0
    %703 = vperm.xlu0 %702, %v663
    %v704 = vpop.permute.xlu0 %703
    %v707 = vunpack.c.l.s4 839922192
    %v708 = vunpack.c.0.s8 %v707
    %v709 = vlaneseq
    %v710 = vshrl.u32 %v709, 7
    %v711 = vsub.s32 %v708, %v710
    %v712 = vrot.slane %v704, %v711
    %714 = vset.pattern.permute.xlu0 0
    %715 = vperm.xlu0 %714, %v664
    %v716 = vpop.permute.xlu0 %715
    %v719 = vunpack.c.l.s4 839922192
    %v720 = vunpack.c.0.s8 %v719
    %v721 = vlaneseq
    %v722 = vshrl.u32 %v721, 7
    %v723 = vsub.s32 %v720, %v722
    %v724 = vrot.slane %v716, %v723
    %726 = vset.pattern.permute.xlu0 0
    %727 = vperm.xlu0 %726, %v665
    %v728 = vpop.permute.xlu0 %727
    %v731 = vunpack.c.l.s4 839922192
    %v732 = vunpack.c.0.s8 %v731
    %v733 = vlaneseq
    %v734 = vshrl.u32 %v733, 7
    %v735 = vsub.s32 %v732, %v734
    %v736 = vrot.slane %v728, %v735
    %738 = vset.pattern.permute.xlu0 0
    %739 = vperm.xlu0 %738, %v666
    %v740 = vpop.permute.xlu0 %739
    %v743 = vunpack.c.l.s4 839922192
    %v744 = vunpack.c.0.s8 %v743
    %v745 = vlaneseq
    %v746 = vshrl.u32 %v745, 7
    %v747 = vsub.s32 %v744, %v746
    %v748 = vrot.slane %v740, %v747
    %750 = vset.pattern.permute.xlu0 0
    %751 = vperm.xlu0 %750, %v667
    %v752 = vpop.permute.xlu0 %751
    %v755 = vunpack.c.l.s4 839922192
    %v756 = vunpack.c.0.s8 %v755
    %v757 = vlaneseq
    %v758 = vshrl.u32 %v757, 7
    %v759 = vsub.s32 %v756, %v758
    %v760 = vrot.slane %v752, %v759
    %762 = vset.pattern.permute.xlu0 0
    %763 = vperm.xlu0 %762, %v668
    %v764 = vpop.permute.xlu0 %763
    %v767 = vunpack.c.l.s4 839922192
    %v768 = vunpack.c.0.s8 %v767
    %v769 = vlaneseq
    %v770 = vshrl.u32 %v769, 7
    %v771 = vsub.s32 %v768, %v770
    %v772 = vrot.slane %v764, %v771
    %774 = vset.pattern.permute.xlu0 0
    %775 = vperm.xlu0 %774, %v669
    %v776 = vpop.permute.xlu0 %775
    %v779 = vunpack.c.l.s4 839922192
    %v780 = vunpack.c.0.s8 %v779
    %v781 = vlaneseq
    %v782 = vshrl.u32 %v781, 7
    %v783 = vsub.s32 %v780, %v782
    %v784 = vrot.slane %v776, %v783
    %786 = vset.pattern.permute.xlu0 0
    %787 = vperm.xlu0 %786, %v670
    %v788 = vpop.permute.xlu0 %787
    %v791 = vunpack.c.l.s4 839922192
    %v792 = vunpack.c.0.s8 %v791
    %v793 = vlaneseq
    %v794 = vshrl.u32 %v793, 7
    %v795 = vsub.s32 %v792, %v794
    %v796 = vrot.slane %v788, %v795
    %798 = vset.pattern.permute.xlu0 0
    %799 = vperm.xlu0 %798, %v671
    %v800 = vpop.permute.xlu0 %799
    %v803 = vunpack.c.l.s4 839922192
    %v804 = vunpack.c.0.s8 %v803
    %v805 = vlaneseq
    %v806 = vshrl.u32 %v805, 7
    %v807 = vsub.s32 %v804, %v806
    %v808 = vrot.slane %v800, %v807
    %810 = vset.pattern.permute.xlu0 0
    %811 = vperm.xlu0 %810, %v672
    %v812 = vpop.permute.xlu0 %811
    %v815 = vunpack.c.l.s4 839922192
    %v816 = vunpack.c.0.s8 %v815
    %v817 = vlaneseq
    %v818 = vshrl.u32 %v817, 7
    %v819 = vsub.s32 %v816, %v818
    %v820 = vrot.slane %v812, %v819
    %822 = vset.pattern.permute.xlu0 0
    %823 = vperm.xlu0 %822, %v673
    %v824 = vpop.permute.xlu0 %823
    %v827 = vunpack.c.l.s4 839922192
    %v828 = vunpack.c.0.s8 %v827
    %v829 = vlaneseq
    %v830 = vshrl.u32 %v829, 7
    %v831 = vsub.s32 %v828, %v830
    %v832 = vrot.slane %v824, %v831
    %834 = vset.pattern.permute.xlu0 0
    %835 = vperm.xlu0 %834, %v674
    %v836 = vpop.permute.xlu0 %835
    %v839 = vunpack.c.l.s4 839922192
    %v840 = vunpack.c.0.s8 %v839
    %v841 = vlaneseq
    %v842 = vshrl.u32 %v841, 7
    %v843 = vsub.s32 %v840, %v842
    %v844 = vrot.slane %v836, %v843
    %846 = vset.pattern.permute.xlu0 0
    %847 = vperm.xlu0 %846, %v675
    %v848 = vpop.permute.xlu0 %847
    %v851 = vunpack.c.l.s4 839922192
    %v852 = vunpack.c.0.s8 %v851
    %v853 = vlaneseq
    %v854 = vshrl.u32 %v853, 7
    %v855 = vsub.s32 %v852, %v854
    %v856 = vrot.slane %v848, %v855
    %858 = vset.pattern.permute.xlu0 0
    %859 = vperm.xlu0 %858, %v676
    %v860 = vpop.permute.xlu0 %859
    %v863 = vunpack.c.l.s4 839922192
    %v864 = vunpack.c.0.s8 %v863
    %v865 = vlaneseq
    %v866 = vshrl.u32 %v865, 7
    %v867 = vsub.s32 %v864, %v866
    %v868 = vrot.slane %v860, %v867
    %v885 = vunpack.c.l.b16 %v688
    %v886 = vunpack.c.l.b16 %v700
    %v887 = vunpack.c.l.b16 %v712
    %v888 = vunpack.c.l.b16 %v724
    %v889 = vunpack.c.l.b16 %v736
    %v890 = vunpack.c.l.b16 %v748
    %v891 = vunpack.c.l.b16 %v760
    %v892 = vunpack.c.l.b16 %v772
    %v893 = vunpack.c.l.b16 %v784
    %v894 = vunpack.c.l.b16 %v796
    %v895 = vunpack.c.l.b16 %v808
    %v896 = vunpack.c.l.b16 %v820
    %v897 = vunpack.c.l.b16 %v832
    %v898 = vunpack.c.l.b16 %v844
    %v899 = vunpack.c.l.b16 %v856
    %v900 = vunpack.c.l.b16 %v868
    %v901 = vpack.c.b16 %v886, %v885
    %v902 = vpack.c.b16 %v888, %v887
    %v903 = vpack.c.b16 %v890, %v889
    %v904 = vpack.c.b16 %v892, %v891
    %v905 = vpack.c.b16 %v894, %v893
    %v906 = vpack.c.b16 %v896, %v895
    %v907 = vpack.c.b16 %v898, %v897
    %v908 = vpack.c.b16 %v900, %v899
    %v917 = vadd.bf16 %v653, %v901
    %v918 = vadd.bf16 %v654, %v902
    %v919 = vadd.bf16 %v655, %v903
    %v920 = vadd.bf16 %v656, %v904
    %v921 = vadd.bf16 %v657, %v905
    %v922 = vadd.bf16 %v658, %v906
    %v923 = vadd.bf16 %v659, %v907
    %v924 = vadd.bf16 %v660, %v908
    %v925 = vmax.bf16 %v917, 0
    %v926 = vmax.bf16 %v918, 0
    %v927 = vmax.bf16 %v919, 0
    %v928 = vmax.bf16 %v920, 0
    %v929 = vmax.bf16 %v921, 0
    %v930 = vmax.bf16 %v922, 0
    %v931 = vmax.bf16 %v923, 0
    %v932 = vmax.bf16 %v924, 0
    %v933 = vld [vmem:[%s5] sm:$0x1]
    %s934 = sld [smem:[#allocation2]]
    %v935 = vstv %s934
    %936 = vmatprep.subr.bf16.mxu0 0
    %937 = vmatpush1.bf16.msra.mxu0 %v925
    %938 = vmatprep.subr.bf16.mxu0 0
    %939 = vmatpush1.bf16.msra.mxu0 %v926
    %940 = vmatprep.subr.bf16.mxu0 0
    %941 = vmatpush1.bf16.msra.mxu0 %v927
    %942 = vmatprep.subr.bf16.mxu0 0
    %943 = vmatpush1.bf16.msra.mxu0 %v928
    %944 = vmatprep.subr.bf16.mxu0 0
    %945 = vmatpush1.bf16.msra.mxu0 %v929
    %946 = vmatprep.subr.bf16.mxu0 0
    %947 = vmatpush1.bf16.msra.mxu0 %v930
    %948 = vmatprep.subr.bf16.mxu0 0
    %949 = vmatpush1.bf16.msra.mxu0 %v931
    %950 = vmatprep.subr.bf16.mxu0 0
    %951 = vmatpush1.bf16.msra.mxu0 %v932
    %952 = vmatprep.subr.bf16.mxu0 0
    %953 = vmatpush1.bf16.msra.mxu0 0
    %954 = vmatprep.subr.bf16.mxu0 0
    %955 = vmatpush1.bf16.msra.mxu0 0
    %956 = vmatprep.subr.bf16.mxu0 0
    %957 = vmatpush1.bf16.msra.mxu0 0
    %958 = vmatprep.subr.bf16.mxu0 0
    %959 = vmatpush1.bf16.msra.mxu0 0
    %960 = vmatprep.subr.bf16.mxu0 0
    %961 = vmatpush1.bf16.msra.mxu0 0
    %962 = vmatprep.subr.bf16.mxu0 0
    %963 = vmatpush1.bf16.msra.mxu0 0
    %964 = vmatprep.subr.bf16.mxu0 0
    %965 = vmatpush1.bf16.msra.mxu0 0
    %966 = vmatprep.subr.bf16.mxu0 0
    %967 = vmatpush1.bf16.msra.mxu0 0
    %968 = vmatprep.mubr.bf16.mxu0 0
    %969 = vmatmul.mubr.bf16.gmra.mrb[0].mxu0 %v933
    %v970 = vpop.f32.mrb[0].mxu0
    %v971 = vadd.f32 %v935, %v970
    %v972 = vpop.f32.mrb[0].mxu0
    %v973 = vpop.f32.mrb[0].mxu0
    %v974 = vpop.f32.mrb[0].mxu0
    %975 = vdwg.mxu0
    %976 = vst [vmem:[#allocation3] sm:$0x1] %v971
    // Predicated region
    $region30: #{tpu_custom_call.1} parent=1 // pred_check
      _
    $region31: #{tpu_custom_call.1} parent=1 // pred_check_branch
      %978 = sbr.rel (0) target = $region33
    $region32: #{tpu_custom_call.1} parent=1 // pred_region
      %s980 = ssub.s32 16, 16
      %981 = vsyncadd [#allocation4], %s980
      %s983 = sshll.u32 [#allocation3], 4
      %s984 = int_to_ptr.vmem [resolvable:$true] %s983
      %986 = dma.vmem_to_hbm [thread:$0]  %s984, 16, %s7, [#allocation4]
    $region33: #{tpu_custom_call.1} parent=1 // pred_fallthru
      _
    // Predicated region
    $region34: #{tpu_custom_call.1} parent=1 // pred_check
      _
    $region35: #{tpu_custom_call.1} parent=1 // pred_check_branch
      %988 = sbr.rel (0) target = $region37
    $region36: #{tpu_custom_call.1} parent=1 // pred_region
      %989 = dma.done [#allocation4], 16
    $region37: #{tpu_custom_call.1} parent=1 // pred_fallthru
      _
    %990 = vsyncpa [#allocation4], 1

</llo_original>
